<compile_context>
chip_gen: v6e
topology: v6e:2x2x1
jax: 0.10.0
libtpu: 0.0.40
codegen_flags: <defaults>
</compile_context>

<pallas_src>
import functools

import jax
import jax.numpy as jnp
from jax import lax
from jax.experimental import pallas as pl
from jax.experimental.pallas import tpu as pltpu

# Squared-norm fill for padded rows/cols: distance becomes ~3e15 so
# relu(delta - dist) is exactly 0 -> no in-kernel padding mask needed.
_SENTINEL = 1e30


def _round_up(x, m):
    return ((x + m - 1) // m) * m


def _pad2(x, rows, cols, fill=0.0):
    r, c = x.shape
    if r == rows and c == cols:
        return x  # skip the extra HBM read+write when already aligned
    return jnp.pad(x, ((0, rows - r), (0, cols - c)), constant_values=fill)


def _tpu_info():
    """Best-effort (vmem_capacity_bytes, tpu_generation)."""
    cap = None
    try:
        cap = int(pltpu.get_tpu_info().vmem_capacity_bytes)
    except Exception:
        cap = None
    gen = 6
    try:
        kind = jax.devices()[0].device_kind.lower()
        if "v7" in kind or "7x" in kind:
            gen = 7
        elif "v6" in kind:
            gen = 6
        elif "v5" in kind:
            gen = 5
        elif "v4" in kind or "v3" in kind or "v2" in kind:
            gen = 4
    except Exception:
        pass
    if cap is None:
        # Unknown -> assume the smallest VMEM (v7x) so we never over-budget.
        cap = (64 << 20) if gen >= 7 else (128 << 20)
    return cap, gen


def _spec(shape, index_map, buffers=None):
    """BlockSpec with optional pipeline depth; falls back if unsupported."""
    if buffers is not None:
        try:
            return pl.BlockSpec(shape, index_map,
                                pipeline_mode=pl.Buffered(buffers))
        except Exception:
            pass
    return pl.BlockSpec(shape, index_map)


def _choose_tiles(n_pad, m_pad, d_pad, itemsize, gen, vmem_cap):
    """Pick (TN, TM, TK).  n_pad/m_pad/d_pad are 128-aligned N/M/D."""
    budget = int(vmem_cap * 0.55)            # headroom for compiler temps
    tm_base = 128 if gen <= 5 else 256       # v5e MXU is 128-wide

    # Row tile: as big as possible (sets how often the ood matrix is
    # re-streamed), but keep >= 2 row tiles on v7x so both TCs get work.
    tn_cap = n_pad
    if gen >= 7 and n_pad >= 256:
        tn_cap = max(128, ((n_pad // 2) // 128) * 128)
    tn_opts = sorted({t for t in (1024, 512, 256, 128, tn_cap) if t <= tn_cap},
                     reverse=True)

    def fits(tn, tm, tk, b_bufs, nk):
        a = 2 * tn * tk * itemsize                   # task tile (double-buf)
        b = b_bufs * tm * tk * itemsize              # ood tile buffers
        temps = (4 if nk > 1 else 3) * tn * tm * 4   # d2/viol/psum (+acc)
        return a + b + temps + 2 * 8 * tm * 4 <= budget

    # Phase 1: full-D tiles (single K step = lowest HBM traffic).
    #   1a: fully-resident ood matrix -> B DMA'd once for the whole kernel.
    for tn in tn_opts:
        if fits(tn, m_pad, d_pad, 2, 1):
            return tn, m_pad, d_pad
    #   1b: stream ood in tm_base-wide column tiles (triple-buffered).
    tm = min(tm_base, m_pad)
    for tn in tn_opts:
        if fits(tn, tm, d_pad, 3, 1):
            return tn, tm, d_pad
    # Phase 2: very large D -> K-tiled accumulation (decouples tiles from D).
    for tk in (4096, 2048, 1024, 512, 256, 128):
        if tk >= d_pad:
            continue
        for tn in tn_opts:
            if fits(tn, tm, tk, 3, 2):
                return tn, tm, tk
    return 128, min(128, m_pad), 128


# ----------------------------------------------------------------------------
# Kernels
# ----------------------------------------------------------------------------
def _ood_loss_small_kernel(a_sq_ref, b_sq_ref, a_ref, b_ref, out_ref, *, delta):
    """Single-tile path: whole problem in VMEM, no grid, no padding."""
    ab = lax.dot_general(a_ref[...], b_ref[...], (((1,), (1,)), ((), ())),
                         preferred_element_type=jnp.float32)          # (N, M)
    d2 = jnp.maximum(a_sq_ref[...] + b_sq_ref[...] - 2.0 * ab, 0.0)
    viol = jnp.maximum(delta - jnp.sqrt(d2), 0.0)
    out_ref[...] = jnp.sum(viol, axis=-1, keepdims=True)              # (N, 1)


def _ood_loss_kernel(a_sq_ref, b_sq_ref, a_ref, b_ref, out_ref, *acc_scratch,
                     delta, tn, tm, nk):
    """Tiled path: grid = (row tiles, col tiles, K tiles)."""
    j = pl.program_id(1)

    # -2 a.b contribution of this (TN, TK) x (TM, TK) tile pair on the MXU.
    ab = lax.dot_general(a_ref[...], b_ref[...], (((1,), (1,)), ((), ())),
                         preferred_element_type=jnp.float32)          # (TN, TM)

    if nk > 1:
        acc_ref = acc_scratch[0]
        k = pl.program_id(2)

        @pl.when(k == 0)
        def _():
            acc_ref[...] = ab

        @pl.when(k != 0)
        def _():
            acc_ref[...] += ab

    def _epilogue():
        ab_tot = ab if nk == 1 else acc_scratch[0][...]
        # Sentinel-padded norms make padded pairs' distance huge -> viol == 0,
        # so no explicit mask is needed.  Clamp absorbs fp cancellation.
        d2 = jnp.maximum(a_sq_ref[...] + b_sq_ref[...] - 2.0 * ab_tot, 0.0)
        viol = jnp.maximum(delta - jnp.sqrt(d2), 0.0)
        # Fold to a vreg-shaped (8, TM) partial sum (pure VPU, lane-dense).
        psum = viol.reshape(tn // 8, 8, tm).sum(axis=0)

        @pl.when(j == 0)
        def _():
            out_ref[...] = psum

        @pl.when(j != 0)
        def _():
            out_ref[...] += psum

    if nk == 1:
        _epilogue()
    else:
        pl.when(pl.program_id(2) == nk - 1)(_epilogue)


# ----------------------------------------------------------------------------
# Wrapper
# ----------------------------------------------------------------------------
def ood_separation_loss(task_embeddings, ood_embeddings, delta=1.0,
                        lambda_ood=1.0, *, stream_bf16=False,
                        tile_override=None):
    """Pallas-TPU equivalent of OODSeparationLoss.forward."""
    N, D = task_embeddings.shape
    M, D2 = ood_embeddings.shape
    assert D == D2, "embedding dims must match"

    scale = lambda_ood / float(N * M)
    delta = float(delta)

    # Squared norms, computed once in f32 (cheap: O(N*D + M*D)).
    a_f32 = task_embeddings.astype(jnp.float32)
    b_f32 = ood_embeddings.astype(jnp.float32)
    a_sq = jnp.sum(a_f32 * a_f32, axis=-1, keepdims=True)        # (N, 1)
    b_sq = jnp.sum(b_f32 * b_f32, axis=-1)[None, :]               # (1, M)

    def _stream(x):
        if stream_bf16 and x.dtype == jnp.float32:
            return x.astype(jnp.bfloat16)   # halves HBM traffic / tile VMEM
        return x

    a_stream = _stream(task_embeddings)
    b_stream = _stream(ood_embeddings)

    # ---- single-tile fast path: tiny problems, no grid, no padding ---------
    if tile_override is None and N <= 256 and M <= 256 and D <= 4096:
        row_sums = pl.pallas_call(
            functools.partial(_ood_loss_small_kernel, delta=delta),
            out_shape=jax.ShapeDtypeStruct((N, 1), jnp.float32),
        )(a_sq, b_sq, a_stream, b_stream)
        return scale * jnp.sum(row_sums)

    # ---- tiled path ---------------------------------------------------------
    vmem_cap, gen = _tpu_info()
    itemsize = jnp.dtype(a_stream.dtype).itemsize

    n_pad128 = _round_up(N, 128)
    m_pad128 = _round_up(M, 128)
    d_pad128 = _round_up(D, 128)
    if tile_override is not None:
        TN, TM, TK = tile_override
    else:
        TN, TM, TK = _choose_tiles(n_pad128, m_pad128, d_pad128,
                                   itemsize, gen, vmem_cap)

    N_pad = _round_up(N, TN)
    M_pad = _round_up(M, TM)
    D_pad = _round_up(D, TK)
    nN, nM, nK = N_pad // TN, M_pad // TM, D_pad // TK

    # Pad (skipped when already aligned).  Embeddings pad with 0 (so the
    # MXU contribution of padded rows/cols is 0); norms pad with the sentinel.
    a_p = _pad2(a_stream, N_pad, D_pad, 0.0)
    b_p = _pad2(b_stream, M_pad, D_pad, 0.0)
    a_sq_p = _pad2(a_sq, N_pad, 1, _SENTINEL)
    b_sq_p = _pad2(b_sq, 1, M_pad, _SENTINEL)

    b_resident = (nM == 1 and nK == 1)   # ood matrix DMA'd exactly once
    in_specs = [
        pl.BlockSpec((TN, 1), lambda i, j, k: (i, 0)),      # task sq-norms
        pl.BlockSpec((1, TM), lambda i, j, k: (0, j)),      # ood  sq-norms
        pl.BlockSpec((TN, TK), lambda i, j, k: (i, k)),     # task tile
        _spec((TM, TK), lambda i, j, k: (j, k),             # ood tile
              buffers=None if b_resident else 3),
    ]
    # Resident (8, TM) accumulator per row tile; constant along j/k so it
    # stays in VMEM across the whole reduction.
    out_spec = pl.BlockSpec((8, TM), lambda i, j, k: (i, 0))
    scratch = [pltpu.VMEM((TN, TM), jnp.float32)] if nK > 1 else []

    kernel = functools.partial(_ood_loss_kernel, delta=delta,
                               tn=TN, tm=TM, nk=nK)

    # Raise the scoped-VMEM limit toward physical so big resident tiles fit.
    vmem_limit = int(vmem_cap * 0.9)

    partials = pl.pallas_call(
        kernel,
        out_shape=jax.ShapeDtypeStruct((nN * 8, TM), jnp.float32),
        grid_spec=pltpu.PrefetchScalarGridSpec(
            num_scalar_prefetch=0,
            grid=(nN, nM, nK),
            in_specs=in_specs,
            out_specs=out_spec,
            scratch_shapes=scratch),
        compiler_params=pltpu.CompilerParams(
            # TODO(synk): try pltpu.CORE_PARALLEL on the row axis for an
            # explicit 2-TC split on v7x once validated on that generation.
            dimension_semantics=("parallel", "arbitrary", "arbitrary"),
            vmem_limit_bytes=vmem_limit),
    )(a_sq_p, b_sq_p, a_p, b_p)

    # Single cross-lane reduce + scale on a tiny array, outside the hot loop.
    return scale * jnp.sum(partials)


def _reference(task, ood, delta=1.0, lambda_ood=1.0):
    # Pure-JAX reference (exact pairwise diff), for sanity checking.
    diff = task[:, None, :] - ood[None, :, :]
    dist = jnp.sqrt(jnp.sum(diff * diff, axis=-1))
    return lambda_ood * jnp.mean(jnp.maximum(delta - dist, 0.0))


if __name__ == "__main__":
    key = jax.random.PRNGKey(0)
    k1, k2, k3, k4 = jax.random.split(key, 4)

    # --- tiny case: exercises the single-tile fast path ----------------------
    N, M, D = 16, 16, 32
    task = jax.random.normal(k1, (N, D), dtype=jnp.float32)
    ood = 0.1 * jax.random.normal(k2, (M, D), dtype=jnp.float32)
    delta, lam = 6.0, 1.0          # typical pair distance ~ sqrt(D) ~ 5.7
    loss = jax.block_until_ready(ood_separation_loss(task, ood, delta, lam))
    ref = _reference(task, ood, delta, lam)
    assert jnp.allclose(loss, ref, atol=1e-5, rtol=1e-4), (loss, ref)

    # --- larger case: forces the tiled path with small tiles so the j/k
    #     accumulation (incl. the K-axis scratch) is exercised ----------------
    N2, M2, D2 = 384, 300, 160
    task2 = jax.random.normal(k3, (N2, D2), dtype=jnp.float32)
    ood2 = 0.5 * jax.random.normal(k4, (M2, D2), dtype=jnp.float32)
    delta2, lam2 = 15.0, 0.5
    loss2 = jax.block_until_ready(
        ood_separation_loss(task2, ood2, delta2, lam2,
                            tile_override=(128, 128, 128)))
    ref2 = _reference(task2, ood2, delta2, lam2)
    assert jnp.allclose(loss2, ref2, atol=1e-4, rtol=1e-4), (loss2, ref2)

    print("KERNEL_OK")
</pallas_src>

<mosaic_0001>
module attributes {stable_mosaic.version = 11 : i64} {
  func.func @_ood_loss_small_kernel(%arg0: memref<16x1xf32, #tpu.memory_space<vmem>>, %arg1: memref<1x16xf32, #tpu.memory_space<vmem>>, %arg2: memref<16x32xf32, #tpu.memory_space<vmem>>, %arg3: memref<16x32xf32, #tpu.memory_space<vmem>>, %arg4: memref<16x1xf32, #tpu.memory_space<vmem>>) attributes {dimension_semantics = [], scalar_prefetch = 0 : i64, scratch_operands = 0 : i64, tpu.core_type = #tpu.core_type<tc>} {
    %c0 = arith.constant 0 : index
    %c0_0 = arith.constant 0 : index
    %0 = vector.load %arg2[%c0, %c0_0] : memref<16x32xf32, #tpu.memory_space<vmem>>, vector<16x32xf32>
    %c0_1 = arith.constant 0 : index
    %c0_2 = arith.constant 0 : index
    %1 = vector.load %arg3[%c0_1, %c0_2] : memref<16x32xf32, #tpu.memory_space<vmem>>, vector<16x32xf32>
    %cst = arith.constant dense<0.000000e+00> : vector<16x16xf32>
    %2 = tpu.matmul %0, %1, %cst {dimension_numbers = #tpu.dot_dimension_numbers<[1], [1], [0], [0], [0, 0, 1, 0], [], []>} : vector<16x32xf32>, vector<16x32xf32>, vector<16x16xf32> -> vector<16x16xf32>
    %c0_3 = arith.constant 0 : index
    %c0_4 = arith.constant 0 : index
    %3 = vector.load %arg0[%c0_3, %c0_4] : memref<16x1xf32, #tpu.memory_space<vmem>>, vector<16x1xf32>
    %c0_5 = arith.constant 0 : index
    %c0_6 = arith.constant 0 : index
    %4 = vector.load %arg1[%c0_5, %c0_6] : memref<1x16xf32, #tpu.memory_space<vmem>>, vector<1x16xf32>
    %5 = vector.broadcast %3 : vector<16x1xf32> to vector<16x16xf32>
    %6 = vector.broadcast %4 : vector<1x16xf32> to vector<16x16xf32>
    %7 = arith.addf %5, %6 : vector<16x16xf32>
    %cst_7 = arith.constant 2.000000e+00 : f32
    %8 = vector.broadcast %cst_7 : f32 to vector<16x16xf32>
    %9 = arith.mulf %8, %2 : vector<16x16xf32>
    %10 = arith.subf %7, %9 : vector<16x16xf32>
    %cst_8 = arith.constant 0.000000e+00 : f32
    %11 = vector.broadcast %cst_8 : f32 to vector<16x16xf32>
    %12 = arith.maximumf %10, %11 : vector<16x16xf32>
    %13 = math.sqrt %12 : vector<16x16xf32>
    %cst_9 = arith.constant 6.000000e+00 : f32
    %14 = vector.broadcast %cst_9 : f32 to vector<16x16xf32>
    %15 = arith.subf %14, %13 : vector<16x16xf32>
    %cst_10 = arith.constant 0.000000e+00 : f32
    %16 = vector.broadcast %cst_10 : f32 to vector<16x16xf32>
    %17 = arith.maximumf %15, %16 : vector<16x16xf32>
    %cst_11 = arith.constant dense<0.000000e+00> : vector<16xf32>
    %18 = vector.multi_reduction <add>, %17, %cst_11 [1] : vector<16x16xf32> to vector<16xf32>
    %19 = vector.shape_cast %18 : vector<16xf32> to vector<16x1xf32>
    %c0_12 = arith.constant 0 : index
    %c0_13 = arith.constant 0 : index
    %20 = vector.load %arg4[%c0_12, %c0_13] : memref<16x1xf32, #tpu.memory_space<vmem>>, vector<16x1xf32>
    tpu.vector_store %arg4[%c0_12, %c0_13], %19 {strides = array<i32>} : memref<16x1xf32, #tpu.memory_space<vmem>>, vector<16x1xf32>,
    return
  }
}

</mosaic_0001>

<llo_original>
// kernel: tpu_custom_call.1
$region0: #{tpu_custom_call.1}
  #allocation0 [shape = 'u32[]', space=smem, size = 0x4, offset = 0x4, fixed_abs, tag = 'smem constant byte address 0x4 - core index']
  #allocation1 [shape = 'u32[144,128]{1,0:T(1,128)}', space=vmem, size = 0x12000, scoped, tag = 'internal scratch']
  %s0 = inlined_call_operand.vmem [shape: f32[16,1], index: 0, kind: input, shape index: {}]
  %s1 = inlined_call_operand.vmem [shape: f32[1,16], index: 1, kind: input, shape index: {}]
  %s2 = inlined_call_operand.vmem [shape: f32[16,32], index: 2, kind: input, shape index: {}]
  %s3 = inlined_call_operand.hbm [shape: f32[16,32], index: 3, kind: input, shape index: {}]
  %s4 = inlined_call_operand.vmem [shape: f32[16,1], index: 4, kind: output, shape index: {}]
  %s5 = sld [smem:[#allocation0]]
  $region30: #{tpu_custom_call.1} parent=0
    _
  %s7 = ssub.s32 1, %s5
  %s8 = scalar_select 0, %s7, %s5
  $region1: #{tpu_custom_call.1} parent=0
    #allocation2 [shape = 'u8[8192]{0}', space=vmem, size = 0x2000, scoped, tag = 'input window, operand 3, single buffered']
    #allocation3 [shape = 's32[1]{0}', space=sflag, size = 0x4, scoped, tag = 'scoped memory for tpu_custom_call.1']
    %9 = vsyncpa [#allocation3], 0
    // Predicated region
    $region2: #{tpu_custom_call.1} parent=1 // pred_check
      _
    $region3: #{tpu_custom_call.1} parent=1 // pred_check_branch
      %11 = sbr.rel (0) target = $region5
    $region4: #{tpu_custom_call.1} parent=1 // pred_region
      _
    $region5: #{tpu_custom_call.1} parent=1 // pred_fallthru
      _
    // Predicated region
    $region6: #{tpu_custom_call.1} parent=1 // pred_check
      _
    $region7: #{tpu_custom_call.1} parent=1 // pred_check_branch
      %13 = sbr.rel (0) target = $region9
    $region8: #{tpu_custom_call.1} parent=1 // pred_region
      _
    $region9: #{tpu_custom_call.1} parent=1 // pred_fallthru
      _
    // Predicated region
    $region10: #{tpu_custom_call.1} parent=1 // pred_check
      _
    $region11: #{tpu_custom_call.1} parent=1 // pred_check_branch
      %15 = sbr.rel (0) target = $region13
    $region12: #{tpu_custom_call.1} parent=1 // pred_region
      _
    $region13: #{tpu_custom_call.1} parent=1 // pred_fallthru
      _
    // Predicated region
    $region14: #{tpu_custom_call.1} parent=1 // pred_check
      _
    $region15: #{tpu_custom_call.1} parent=1 // pred_check_branch
      %17 = sbr.rel (0) target = $region17
    $region16: #{tpu_custom_call.1} parent=1 // pred_region
      %s19 = ssub.s32 256, 256
      %20 = vsyncadd [#allocation3], %s19
      %s21 = sshll.u32 [#allocation2], 4
      %s22 = int_to_ptr.vmem [resolvable:$true] %s21
      %27 = dma.hbm_to_vmem [thread:$0]  %s3, 256, %s22, [#allocation3], 128, 128, 8
    $region17: #{tpu_custom_call.1} parent=1 // pred_fallthru
      _
    // Predicated region
    $region18: #{tpu_custom_call.1} parent=1 // pred_check
      _
    $region19: #{tpu_custom_call.1} parent=1 // pred_check_branch
      %29 = sbr.rel (0) target = $region21
    $region20: #{tpu_custom_call.1} parent=1 // pred_region
      %30 = dma.done [#allocation3], 256
    $region21: #{tpu_custom_call.1} parent=1 // pred_fallthru
      _
    %v31 = vld [vmem:[%s2] sm:$0xff]
    %v32 = vld [vmem:[%s2 + $0x8] sm:$0xff]
    %v33 = vld [vmem:[#allocation2] sm:$0xff]
    %v34 = vld [vmem:[#allocation2 + $0x8] sm:$0xff]
    %vm35 = vcmask 261120
    %v37 = vsel %vm35, %v31, 0
    %v40 = vsel %vm35, %v32, 0
    %v43 = vsel %vm35, %v33, 0
    %v46 = vsel %vm35, %v34, 0
    %48 = vmatprep.subr.mxu0 0.0
    %49 = vmatpush1.xpose.msra.mxu0 0.0
    %50 = vmatprep.subr.mxu0 0.0
    %51 = vmatpush1.xpose.msra.mxu0 0.0
    %52 = vmatprep.subr.mxu0 0.0
    %53 = vmatpush1.xpose.msra.mxu0 0.0
    %54 = vmatprep.subr.mxu0 0.0
    %55 = vmatpush1.xpose.msra.mxu0 0.0
    %56 = vmatprep.subr.mxu0 0.0
    %57 = vmatpush1.xpose.msra.mxu0 0.0
    %58 = vmatprep.subr.mxu0 0.0
    %59 = vmatpush1.xpose.msra.mxu0 0.0
    %60 = vmatprep.subr.mxu0 0.0
    %61 = vmatpush1.xpose.msra.mxu0 0.0
    %62 = vmatprep.subr.mxu0 0.0
    %63 = vmatpush1.xpose.msra.mxu0 0.0
    %64 = vmatprep.subr.mxu0 0.0
    %65 = vmatpush1.xpose.msra.mxu0 0.0
    %66 = vmatprep.subr.mxu0 0.0
    %67 = vmatpush1.xpose.msra.mxu0 0.0
    %68 = vmatprep.subr.mxu0 0.0
    %69 = vmatpush1.xpose.msra.mxu0 0.0
    %70 = vmatprep.subr.mxu0 0.0
    %71 = vmatpush1.xpose.msra.mxu0 0.0
    %72 = vmatprep.subr.mxu0 0.0
    %73 = vmatpush1.xpose.msra.mxu0 0.0
    %74 = vmatprep.subr.mxu0 0.0
    %75 = vmatpush1.xpose.msra.mxu0 0.0
    %76 = vmatprep.subr.mxu0 0.0
    %77 = vmatpush1.xpose.msra.mxu0 %v46
    %78 = vmatprep.subr.mxu0 0.0
    %79 = vmatpush1.xpose.msra.mxu0 %v43
    %80 = vmatprep.subr.mxu0 0.0
    %81 = vmatpush2.xpose.msra.mxu0 0.0
    %82 = vmatprep.subr.mxu0 0.0
    %83 = vmatpush2.xpose.msra.mxu0 0.0
    %84 = vmatprep.subr.mxu0 0.0
    %85 = vmatpush2.xpose.msra.mxu0 0.0
    %86 = vmatprep.subr.mxu0 0.0
    %87 = vmatpush2.xpose.msra.mxu0 0.0
    %88 = vmatprep.subr.mxu0 0.0
    %89 = vmatpush2.xpose.msra.mxu0 0.0
    %90 = vmatprep.subr.mxu0 0.0
    %91 = vmatpush2.xpose.msra.mxu0 0.0
    %92 = vmatprep.subr.mxu0 0.0
    %93 = vmatpush2.xpose.msra.mxu0 0.0
    %94 = vmatprep.subr.mxu0 0.0
    %95 = vmatpush2.xpose.msra.mxu0 0.0
    %96 = vmatprep.subr.mxu0 0.0
    %97 = vmatpush2.xpose.msra.mxu0 0.0
    %98 = vmatprep.subr.mxu0 0.0
    %99 = vmatpush2.xpose.msra.mxu0 0.0
    %100 = vmatprep.subr.mxu0 0.0
    %101 = vmatpush2.xpose.msra.mxu0 0.0
    %102 = vmatprep.subr.mxu0 0.0
    %103 = vmatpush2.xpose.msra.mxu0 0.0
    %104 = vmatprep.subr.mxu0 0.0
    %105 = vmatpush2.xpose.msra.mxu0 0.0
    %106 = vmatprep.subr.mxu0 0.0
    %107 = vmatpush2.xpose.msra.mxu0 0.0
    %108 = vmatprep.subr.mxu0 0.0
    %109 = vmatpush2.xpose.msra.mxu0 0.0
    %110 = vmatprep.subr.mxu0 0.0
    %111 = vmatpush2.xpose.msra.mxu0 0.0
    %112 = vmatprep.mubr.f32.mxu0 0.0
    %113 = vmatmul.mubr.f32.gmra.mxu0 %v37
    %v114 = vpop.f32.mrf.mxu0
    %v115 = vadd.f32 0.0, %v114
    %v116 = vpop.f32.mrf.mxu0
    %117 = vmatprep.mubr.f32.mxu0 0.0
    %118 = vmatmul.mubr.f32.gmra.mxu0 %v40
    %v119 = vpop.f32.mrf.mxu0
    %v120 = vadd.f32 0.0, %v119
    %v121 = vpop.f32.mrf.mxu0
    %122 = vdwg.mxu0
    %v123 = vld [vmem:[%s0] sm:$0xff]
    %v124 = vld [vmem:[%s0 + $0x8] sm:$0xff]
    %v125 = vld [vmem:[%s1] sm:$0x1]
    %127 = vset.pattern.permute.xlu0 0
    %128 = vperm.xlu0 %127, %v123
    %v129 = vpop.permute.xlu0 %128
    %132 = vset.pattern.permute.xlu0 0
    %133 = vperm.xlu0 %132, %v124
    %v134 = vpop.permute.xlu0 %133
    %v137 = vlaneseq
    %v138 = vshrl.u32 %v137, 7
    %v139 = vsub.s32 0, %v138
    %v140 = vrot.slane %v125, %v139
    %v142 = vadd.f32 %v129, %v140
    %v143 = vadd.f32 %v134, %v140
    %v144 = vmul.f32 %v115, 2.0
    %v145 = vmul.f32 %v120, 2.0
    %v146 = vsub.f32 %v142, %v144
    %v147 = vsub.f32 %v143, %v145
    %v148 = vmax.f32 %v146, 0.0
    %v149 = vmax.f32 %v147, 0.0
    %v150 = vrsqrt.pop %v148
    %v151 = vmul.f32 %v148, %v150
    %vm152 = vcmp.eq.f32.partialorder %v148, inf
    %v153 = vsel %vm152, %v148, %v151
    %vm154 = vcmp.eq.f32.partialorder %v148, 0.0
    %v155 = vand.u32 %v148, 2147483648
    %v156 = vsel %vm154, %v155, %v153
    %v157 = vrsqrt.pop %v149
    %v158 = vmul.f32 %v149, %v157
    %vm159 = vcmp.eq.f32.partialorder %v149, inf
    %v160 = vsel %vm159, %v149, %v158
    %vm161 = vcmp.eq.f32.partialorder %v149, 0.0
    %v162 = vand.u32 %v149, 2147483648
    %v163 = vsel %vm161, %v162, %v160
    %v164 = vsub.f32 6.0, %v156
    %v165 = vsub.f32 6.0, %v163
    %v166 = vmax.f32 %v164, 0.0
    %v167 = vmax.f32 %v165, 0.0
    %vm168 = vcmask 130048
    %v169 = vsel %vm168, %v166, 0.0
    %170 = vadd.xlane.f32.xlu0 %v169
    %v171 = vpop.xlane.xlu0 %170
    %v172 = vsel %vm168, %v167, 0.0
    %173 = vadd.xlane.f32.xlu0 %v172
    %v174 = vpop.xlane.xlu0 %173
    %vm175 = vcmask 7168
    %176 = vst.msk [vmem:[%s4] sm:$0xff] %vm175, %v171
    %177 = vst.msk [vmem:[%s4 + $0x8] sm:$0xff] %vm175, %v174
    // Predicated region
    $region22: #{tpu_custom_call.1} parent=1 // pred_check
      _
    $region23: #{tpu_custom_call.1} parent=1 // pred_check_branch
      %179 = sbr.rel (0) target = $region25
    $region24: #{tpu_custom_call.1} parent=1 // pred_region
      _
    $region25: #{tpu_custom_call.1} parent=1 // pred_fallthru
      _
    // Predicated region
    $region26: #{tpu_custom_call.1} parent=1 // pred_check
      _
    $region27: #{tpu_custom_call.1} parent=1 // pred_check_branch
      %181 = sbr.rel (0) target = $region29
    $region28: #{tpu_custom_call.1} parent=1 // pred_region
      _
    $region29: #{tpu_custom_call.1} parent=1 // pred_fallthru
      _
    %182 = vsyncpa [#allocation3], 1

</llo_original>
